<compile_context>
chip_gen: v7x
topology: tpu7x:2x2x1
jax: 0.10.0
libtpu: 0.0.40
codegen_flags: <defaults>
</compile_context>

<pallas_src>
import functools

import jax
import jax.numpy as jnp
from jax import lax
from jax.experimental import pallas as pl
from jax.experimental.pallas import tpu as pltpu


def _mlp_kernel(x_ref, w1_ref, b1_ref, w2_ref, b2_ref, w3_ref, b3_ref, o_ref):
    # x_ref : (TB, D_in)  x.dtype (f32 or bf16, streamed)
    # w1_ref: (H, D_in)   x.dtype            b1_ref: (H, 1)  f32
    # w2_ref: (H2, H)     f32                b2_ref: (H2, 1) f32
    # w3_ref: (H2, 1)     f32                b3_ref: (1, 1)  f32 in SMEM
    # o_ref : (1, 1, TB)  f32

    # Layer 1: contract D_in of both operands -> (H, TB); batch lands on lanes.
    h1 = lax.dot_general(
        w1_ref[...], x_ref[...],
        dimension_numbers=(((1,), (1,)), ((), ())),
        preferred_element_type=jnp.float32,
    )
    h1 = jnp.maximum(h1 + b1_ref[...], 0.0)          # f32 bias + ReLU (lane-dense)

    # Layer 2: (H2, H) @ (H, TB) -> (H2, TB), f32 accumulate.
    h2 = jnp.dot(w2_ref[...], h1, preferred_element_type=jnp.float32)
    h2 = jnp.maximum(h2 + b2_ref[...], 0.0)

    # Layer 3 (out_features == 1): keep it off the MXU.  VPU multiply + sublane
    # reduction (XLU) yields a lane-dense (1, TB) row directly; b3 is an SMEM
    # scalar added after the reduction.
    out = jnp.sum(h2 * w3_ref[...], axis=0, keepdims=True) + b3_ref[0, 0]

    o_ref[...] = out.reshape(o_ref.shape).astype(o_ref.dtype)


def _round_up(n, m):
    return (n + m - 1) // m * m


def _cdiv(a, b):
    return -(-a // b)


def _choose_tb(batch, itemsize, tb_max):
    """Pick the batch tile.

    Big enough that the ~0.35us per-grid-step overhead amortizes against the x
    DMA, small enough that the lane-padded, double-buffered (TB, D_in) x stream
    stays within a v7x-safe VMEM budget, lane-aligned (multiple of 128), and
    sized so v7x's two TensorCores both get grid steps when B is large enough.
    """
    # A (TB, D_in) block with D_in=32 lane-pads to TB*128*itemsize bytes in VMEM.
    per_buffer_budget = 8 * 1024 * 1024            # ~16 MiB double-buffered
    cap = per_buffer_budget // (128 * itemsize)    # 16384 (f32) / 32768 (bf16)
    tb = min(tb_max, cap)

    half = _cdiv(batch, 2)
    if half >= 128:                                # ensure >= 2 tiles for 2 TCs
        tb = min(tb, _round_up(half, 128))
    tb = max(128, _round_up(tb, 128))              # lane-aligned tile

    if batch < tb:                                 # tiny batches: one exact tile
        return _round_up(batch, 8)

    nt = _cdiv(batch, tb)
    if nt > 1 and nt % 2 == 1:                     # prefer an even tile count
        tb = max(128, _round_up(_cdiv(batch, nt + 1), 128))
    return tb


@functools.partial(jax.jit, static_argnames=("tb_max",))
def simple_nn_forward(x, w1, b1, w2, b2, w3, b3, *, tb_max=32768):
    """Forward pass of SimpleNN.

    PyTorch-layout parameters:
      w1: (hidden, input_size), b1: (hidden,)
      w2: (64, hidden),         b2: (64,)
      w3: (1, 64),              b3: (1,)
    x: (B, input_size).  x is streamed in its own dtype (pass bf16 only if the
    producer already emits bf16 — no wrapper-side cast).  Returns (B, 1) f32.
    """
    B, D_in = x.shape
    H = w1.shape[0]
    H2 = w2.shape[0]

    TB = _choose_tb(B, x.dtype.itemsize, tb_max)
    num_tiles = _cdiv(B, TB)

    # No wrapper-side pad / astype of x: the dominant HBM stream is read once.
    # The ragged last tile's out-of-bounds rows only feed output lane columns
    # >= B, which are sliced off below (batch elements are independent columns).
    w1c = w1.astype(x.dtype)                       # tiny; matches x for the MXU dot
    b1c = b1.reshape(H, 1).astype(jnp.float32)
    w2c = w2.astype(jnp.float32)
    b2c = b2.reshape(H2, 1).astype(jnp.float32)
    w3c = w3.reshape(H2, 1).astype(jnp.float32)
    b3c = b3.reshape(1, 1).astype(jnp.float32)

    out_slab = pl.pallas_call(
        _mlp_kernel,
        out_shape=jax.ShapeDtypeStruct((num_tiles, 1, TB), jnp.float32),
        grid=(num_tiles,),
        in_specs=[
            pl.BlockSpec((TB, D_in), lambda i: (i, 0)),      # x: streamed batch tiles
            pl.BlockSpec((H, D_in), lambda i: (0, 0)),       # resident weights/biases
            pl.BlockSpec((H, 1), lambda i: (0, 0)),
            pl.BlockSpec((H2, H), lambda i: (0, 0)),
            pl.BlockSpec((H2, 1), lambda i: (0, 0)),
            pl.BlockSpec((H2, 1), lambda i: (0, 0)),
            pl.BlockSpec(memory_space=pltpu.MemorySpace.SMEM),  # b3 as SMEM scalar
        ],
        out_specs=pl.BlockSpec((1, 1, TB), lambda i: (i, 0, 0)),  # lane-dense row
        compiler_params=pltpu.CompilerParams(
            dimension_semantics=("parallel",),               # shard batch over TCs
            vmem_limit_bytes=48 * 1024 * 1024,               # headroom for big tiles
        ),
    )(x, w1c, b1c, w2c, b2c, w3c, b3c)

    # (num_tiles, 1, TB) slab -> (B, 1), dropping the ragged-tile padding.
    return out_slab.reshape(num_tiles * TB, 1)[:B]


def reference_forward(x, w1, b1, w2, b2, w3, b3):
    xf = x.astype(jnp.float32)
    h1 = jnp.maximum(xf @ w1.T + b1, 0.0)
    h2 = jnp.maximum(h1 @ w2.T + b2, 0.0)
    return h2 @ w3.T + b3


def init_params(key, input_size, hidden_size):
    """Deterministic torch-layout init (Kaiming-uniform-ish, like nn.Linear)."""
    ks = jax.random.split(key, 6)

    def linear(kw, kb, fan_in, fan_out):
        bound = 1.0 / (fan_in ** 0.5)
        w = jax.random.uniform(kw, (fan_out, fan_in), jnp.float32, -bound, bound)
        b = jax.random.uniform(kb, (fan_out,), jnp.float32, -bound, bound)
        return w, b

    w1, b1 = linear(ks[0], ks[1], input_size, hidden_size)
    w2, b2 = linear(ks[2], ks[3], hidden_size, 64)
    w3, b3 = linear(ks[4], ks[5], 64, 1)
    return w1, b1, w2, b2, w3, b3


if __name__ == "__main__":
    key = jax.random.PRNGKey(0)
    kx, kp = jax.random.split(key)

    batch, input_size, hidden_size = 8, 32, 32
    x = jax.random.normal(kx, (batch, input_size), jnp.float32)
    params = init_params(kp, input_size, hidden_size)
    ref = reference_forward(x, *params)

    # f32 path (single small tile).
    out = simple_nn_forward(x, *params)
    jax.block_until_ready(out)
    assert out.shape == (batch, 1)
    assert jnp.allclose(out, ref, atol=1e-5, rtol=1e-5)

    # Multi-tile grid + ragged last block (forced small tile: 3 tiles of 128).
    batch2 = 300
    x2 = jax.random.normal(jax.random.PRNGKey(1), (batch2, input_size), jnp.float32)
    out2 = simple_nn_forward(x2, *params, tb_max=128)
    jax.block_until_ready(out2)
    ref2 = reference_forward(x2, *params)
    assert out2.shape == (batch2, 1)
    assert jnp.allclose(out2, ref2, atol=1e-5, rtol=1e-5)

    # bf16-producer path: x already arrives in bf16, streamed without any
    # wrapper-side cast (halves the dominant x HBM stream on v6e/v7x).
    x3 = x.astype(jnp.bfloat16)
    out3 = simple_nn_forward(x3, *params)
    jax.block_until_ready(out3)
    assert out3.shape == (batch, 1)
    assert jnp.allclose(out3, ref, atol=5e-2, rtol=5e-2)

    print("KERNEL_OK")
</pallas_src>

<mosaic_0001>
module attributes {stable_mosaic.version = 11 : i64} {
  func.func @_mlp_kernel(%arg0: i32, %arg1: memref<8x32xf32, #tpu.memory_space<vmem>>, %arg2: memref<32x32xf32, #tpu.memory_space<vmem>>, %arg3: memref<32x1xf32, #tpu.memory_space<vmem>>, %arg4: memref<64x32xf32, #tpu.memory_space<vmem>>, %arg5: memref<64x1xf32, #tpu.memory_space<vmem>>, %arg6: memref<64x1xf32, #tpu.memory_space<vmem>>, %arg7: memref<1x1xf32, #tpu.memory_space<smem>>, %arg8: memref<1x1x8xf32, #tpu.memory_space<vmem>>) attributes {dimension_semantics = [#tpu.dimension_semantics<parallel>], iteration_bounds = array<i64: 1>, scalar_prefetch = 0 : i64, scratch_operands = 0 : i64, tpu.core_type = #tpu.core_type<tc>, window_params = [{transform_indices = @transform_0, window_bounds = array<i64: 8, 32>}, {pipeline_mode = #tpu.pipeline_mode<synchronous>, transform_indices = @transform_1, window_bounds = array<i64: 32, 32>}, {pipeline_mode = #tpu.pipeline_mode<synchronous>, transform_indices = @transform_2, window_bounds = array<i64: 32, 1>}, {pipeline_mode = #tpu.pipeline_mode<synchronous>, transform_indices = @transform_3, window_bounds = array<i64: 64, 32>}, {pipeline_mode = #tpu.pipeline_mode<synchronous>, transform_indices = @transform_4, window_bounds = array<i64: 64, 1>}, {pipeline_mode = #tpu.pipeline_mode<synchronous>, transform_indices = @transform_5, window_bounds = array<i64: 64, 1>}, {transform_indices = @transform_6, window_bounds = array<i64: 1, 1>}, {transform_indices = @transform_7, window_bounds = array<i64: 1, 1, 8>}]} {
    %c0 = arith.constant 0 : index
    %c0_0 = arith.constant 0 : index
    %0 = vector.load %arg2[%c0, %c0_0] : memref<32x32xf32, #tpu.memory_space<vmem>>, vector<32x32xf32>
    %c0_1 = arith.constant 0 : index
    %c0_2 = arith.constant 0 : index
    %1 = vector.load %arg1[%c0_1, %c0_2] : memref<8x32xf32, #tpu.memory_space<vmem>>, vector<8x32xf32>
    %cst = arith.constant dense<0.000000e+00> : vector<32x8xf32>
    %2 = tpu.matmul %0, %1, %cst {dimension_numbers = #tpu.dot_dimension_numbers<[1], [1], [0], [0], [0, 0, 1, 0], [], []>} : vector<32x32xf32>, vector<8x32xf32>, vector<32x8xf32> -> vector<32x8xf32>
    %c0_3 = arith.constant 0 : index
    %c0_4 = arith.constant 0 : index
    %3 = vector.load %arg3[%c0_3, %c0_4] : memref<32x1xf32, #tpu.memory_space<vmem>>, vector<32x1xf32>
    %4 = vector.broadcast %3 : vector<32x1xf32> to vector<32x8xf32>
    %5 = arith.addf %2, %4 : vector<32x8xf32>
    %cst_5 = arith.constant 0.000000e+00 : f32
    %6 = vector.broadcast %cst_5 : f32 to vector<32x8xf32>
    %7 = arith.maximumf %5, %6 : vector<32x8xf32>
    %c0_6 = arith.constant 0 : index
    %c0_7 = arith.constant 0 : index
    %8 = vector.load %arg4[%c0_6, %c0_7] : memref<64x32xf32, #tpu.memory_space<vmem>>, vector<64x32xf32>
    %cst_8 = arith.constant dense<0.000000e+00> : vector<64x8xf32>
    %9 = tpu.matmul %8, %7, %cst_8 {dimension_numbers = #tpu.dot_dimension_numbers<[1], [0], [0], [1], [0, 0, 1, 1], [], []>} : vector<64x32xf32>, vector<32x8xf32>, vector<64x8xf32> -> vector<64x8xf32>
    %c0_9 = arith.constant 0 : index
    %c0_10 = arith.constant 0 : index
    %10 = vector.load %arg5[%c0_9, %c0_10] : memref<64x1xf32, #tpu.memory_space<vmem>>, vector<64x1xf32>
    %11 = vector.broadcast %10 : vector<64x1xf32> to vector<64x8xf32>
    %12 = arith.addf %9, %11 : vector<64x8xf32>
    %cst_11 = arith.constant 0.000000e+00 : f32
    %13 = vector.broadcast %cst_11 : f32 to vector<64x8xf32>
    %14 = arith.maximumf %12, %13 : vector<64x8xf32>
    %c0_12 = arith.constant 0 : index
    %c0_13 = arith.constant 0 : index
    %15 = vector.load %arg6[%c0_12, %c0_13] : memref<64x1xf32, #tpu.memory_space<vmem>>, vector<64x1xf32>
    %16 = vector.broadcast %15 : vector<64x1xf32> to vector<64x8xf32>
    %17 = arith.mulf %14, %16 : vector<64x8xf32>
    %cst_14 = arith.constant dense<0.000000e+00> : vector<8xf32>
    %18 = vector.multi_reduction <add>, %17, %cst_14 [0] : vector<64x8xf32> to vector<8xf32>
    %19 = vector.shape_cast %18 : vector<8xf32> to vector<1x8xf32>
    %c0_15 = arith.constant 0 : index
    %c0_16 = arith.constant 0 : index
    %20 = memref.load %arg7[%c0_15, %c0_16] : memref<1x1xf32, #tpu.memory_space<smem>>
    %21 = vector.broadcast %20 : f32 to vector<1x8xf32>
    %22 = arith.addf %19, %21 : vector<1x8xf32>
    %23 = vector.shape_cast %22 : vector<1x8xf32> to vector<1x1x8xf32>
    %c0_17 = arith.constant 0 : index
    %c0_18 = arith.constant 0 : index
    %c0_19 = arith.constant 0 : index
    %24 = vector.load %arg8[%c0_17, %c0_18, %c0_19] : memref<1x1x8xf32, #tpu.memory_space<vmem>>, vector<1x1x8xf32>
    tpu.vector_store %arg8[%c0_17, %c0_18, %c0_19], %23 {strides = array<i32>} : memref<1x1x8xf32, #tpu.memory_space<vmem>>, vector<1x1x8xf32>,
    return
  }
  func.func @transform_0(%arg0: i32) -> (i32, i32) {
    %c0_i32 = arith.constant 0 : i32
    %c0_i32_0 = arith.constant 0 : i32
    return %arg0, %c0_i32 : i32, i32
  }
  func.func @transform_1(%arg0: i32) -> (i32, i32) {
    %c0_i32 = arith.constant 0 : i32
    %c0_i32_0 = arith.constant 0 : i32
    %c0_i32_1 = arith.constant 0 : i32
    return %c0_i32, %c0_i32_0 : i32, i32
  }
  func.func @transform_2(%arg0: i32) -> (i32, i32) {
    %c0_i32 = arith.constant 0 : i32
    %c0_i32_0 = arith.constant 0 : i32
    %c0_i32_1 = arith.constant 0 : i32
    return %c0_i32, %c0_i32_0 : i32, i32
  }
  func.func @transform_3(%arg0: i32) -> (i32, i32) {
    %c0_i32 = arith.constant 0 : i32
    %c0_i32_0 = arith.constant 0 : i32
    %c0_i32_1 = arith.constant 0 : i32
    return %c0_i32, %c0_i32_0 : i32, i32
  }
  func.func @transform_4(%arg0: i32) -> (i32, i32) {
    %c0_i32 = arith.constant 0 : i32
    %c0_i32_0 = arith.constant 0 : i32
    %c0_i32_1 = arith.constant 0 : i32
    return %c0_i32, %c0_i32_0 : i32, i32
  }
  func.func @transform_5(%arg0: i32) -> (i32, i32) {
    %c0_i32 = arith.constant 0 : i32
    %c0_i32_0 = arith.constant 0 : i32
    %c0_i32_1 = arith.constant 0 : i32
    return %c0_i32, %c0_i32_0 : i32, i32
  }
  func.func @transform_6(%arg0: i32) -> (i32, i32) {
    %c0_i32 = arith.constant 0 : i32
    %c0_i32_0 = arith.constant 0 : i32
    %c0_i32_1 = arith.constant 0 : i32
    return %c0_i32, %c0_i32_0 : i32, i32
  }
  func.func @transform_7(%arg0: i32) -> (i32, i32, i32) {
    %c0_i32 = arith.constant 0 : i32
    %c0_i32_0 = arith.constant 0 : i32
    %c0_i32_1 = arith.constant 0 : i32
    return %arg0, %c0_i32, %c0_i32_0 : i32, i32, i32
  }
}

</mosaic_0001>

<llo_original>
// kernel: simple_nn_forward.1
$region0: #{simple_nn_forward.1}
  #allocation0 [shape = 'u32[]', space=smem, size = 0x4, offset = 0x4, fixed_abs, tag = 'smem constant byte address 0x4 - core index']
  #allocation1 [shape = 'u32[144,128]{1,0:T(1,128)}', space=vmem, size = 0x12000, scoped, tag = 'internal scratch']
  #allocation2 [shape = 'f32[1,1]{1,0:T(1,128)S(6)}', space=smem, size = 0x200, scoped, tag = 'scoped memory for simple_nn_forward.1']
  %s0 = inlined_call_operand.vmem [shape: f32[8,32], index: 0, kind: input, shape index: {}]
  %s1 = inlined_call_operand.vmem [shape: f32[32,32], index: 1, kind: input, shape index: {}]
  %s2 = inlined_call_operand.vmem [shape: f32[32,1], index: 2, kind: input, shape index: {}]
  %s3 = inlined_call_operand.vmem [shape: f32[64,32], index: 3, kind: input, shape index: {}]
  %s4 = inlined_call_operand.vmem [shape: f32[64,1], index: 4, kind: input, shape index: {}]
  %s5 = inlined_call_operand.vmem [shape: f32[64,1], index: 5, kind: input, shape index: {}]
  %s6 = inlined_call_operand.<no memory space> [shape: f32[1,1], index: 6, kind: input, shape index: {}]
  %s7 = inlined_call_operand.hbm [shape: f32[1,1,8], index: 7, kind: output, shape index: {}]
  %s8 = sld [smem:[#allocation0]]
  $region38: #{simple_nn_forward.1} parent=0
    _
  %s10 = ssub.s32 1, %s8
  %s11 = scalar_select 0, %s10, %s8
  %12 = sst [smem:[#allocation2]] %s6
  $region1: #{simple_nn_forward.1} parent=0
    #allocation3 [shape = 'u8[512]{0}', space=vmem, size = 0x400, scoped, tag = 'output window, operand 0, single buffered']
    #allocation4 [shape = 's32[1]{0}', space=sflag, size = 0x4, scoped, tag = 'scoped memory for simple_nn_forward.1']
    %13 = vsyncpa [#allocation4], 0
    // Predicated region
    $region2: #{simple_nn_forward.1} parent=1 // pred_check
      _
    $region3: #{simple_nn_forward.1} parent=1 // pred_check_branch
      %15 = sbr.rel (0) target = $region5
    $region4: #{simple_nn_forward.1} parent=1 // pred_region
      _
    $region5: #{simple_nn_forward.1} parent=1 // pred_fallthru
      _
    // Predicated region
    $region6: #{simple_nn_forward.1} parent=1 // pred_check
      _
    $region7: #{simple_nn_forward.1} parent=1 // pred_check_branch
      %17 = sbr.rel (0) target = $region9
    $region8: #{simple_nn_forward.1} parent=1 // pred_region
      _
    $region9: #{simple_nn_forward.1} parent=1 // pred_fallthru
      _
    // Predicated region
    $region10: #{simple_nn_forward.1} parent=1 // pred_check
      _
    $region11: #{simple_nn_forward.1} parent=1 // pred_check_branch
      %19 = sbr.rel (0) target = $region13
    $region12: #{simple_nn_forward.1} parent=1 // pred_region
      _
    $region13: #{simple_nn_forward.1} parent=1 // pred_fallthru
      _
    // Predicated region
    $region14: #{simple_nn_forward.1} parent=1 // pred_check
      _
    $region15: #{simple_nn_forward.1} parent=1 // pred_check_branch
      %21 = sbr.rel (0) target = $region17
    $region16: #{simple_nn_forward.1} parent=1 // pred_region
      _
    $region17: #{simple_nn_forward.1} parent=1 // pred_fallthru
      _
    // Predicated region
    $region18: #{simple_nn_forward.1} parent=1 // pred_check
      _
    $region19: #{simple_nn_forward.1} parent=1 // pred_check_branch
      %23 = sbr.rel (0) target = $region21
    $region20: #{simple_nn_forward.1} parent=1 // pred_region
      _
    $region21: #{simple_nn_forward.1} parent=1 // pred_fallthru
      _
    // Predicated region
    $region22: #{simple_nn_forward.1} parent=1 // pred_check
      _
    $region23: #{simple_nn_forward.1} parent=1 // pred_check_branch
      %25 = sbr.rel (0) target = $region25
    $region24: #{simple_nn_forward.1} parent=1 // pred_region
      _
    $region25: #{simple_nn_forward.1} parent=1 // pred_fallthru
      _
    // Predicated region
    $region26: #{simple_nn_forward.1} parent=1 // pred_check
      _
    $region27: #{simple_nn_forward.1} parent=1 // pred_check_branch
      %27 = sbr.rel (0) target = $region29
    $region28: #{simple_nn_forward.1} parent=1 // pred_region
      _
    $region29: #{simple_nn_forward.1} parent=1 // pred_fallthru
      _
    %v28 = vld [vmem:[%s1] sm:$0xff]
    %v29 = vld [vmem:[%s1 + $0x8] sm:$0xff]
    %v30 = vld [vmem:[%s1 + $0x10] sm:$0xff]
    %v31 = vld [vmem:[%s1 + $0x18] sm:$0xff]
    %v32 = vld [vmem:[%s0] sm:$0xff]
    %v33 = vld [vmem:[%s2] sm:$0xff]
    %v34 = vld [vmem:[%s2 + $0x8] sm:$0xff]
    %v35 = vld [vmem:[%s2 + $0x10] sm:$0xff]
    %v36 = vld [vmem:[%s2 + $0x18] sm:$0xff]
    %38 = vset.pattern.permute.xlu0 0
    %39 = vperm.xlu0 %38, %v33
    %v40 = vpop.permute.xlu0 %39
    %43 = vset.pattern.permute.xlu0 0
    %44 = vperm.xlu0 %43, %v34
    %v45 = vpop.permute.xlu0 %44
    %48 = vset.pattern.permute.xlu0 0
    %49 = vperm.xlu0 %48, %v35
    %v50 = vpop.permute.xlu0 %49
    %53 = vset.pattern.permute.xlu0 0
    %54 = vperm.xlu0 %53, %v36
    %v55 = vpop.permute.xlu0 %54
    %vm57 = vcmask 261120
    %v59 = vsel %vm57, %v28, 0
    %v62 = vsel %vm57, %v29, 0
    %v65 = vsel %vm57, %v30, 0
    %v68 = vsel %vm57, %v31, 0
    %v71 = vsel %vm57, %v32, 0
    %73 = vmatprep.subr.mxu0 0.0
    %74 = vmatpush1.xpose.msra.mxu0 %v71
    %75 = vmatprep.subr.mxu0 0.0
    %76 = vmatpush1.xpose.msra.mxu0 0.0
    %77 = vmatprep.subr.mxu0 0.0
    %78 = vmatpush1.xpose.msra.mxu0 0.0
    %79 = vmatprep.subr.mxu0 0.0
    %80 = vmatpush1.xpose.msra.mxu0 0.0
    %81 = vmatprep.subr.mxu0 0.0
    %82 = vmatpush1.xpose.msra.mxu0 0.0
    %83 = vmatprep.subr.mxu0 0.0
    %84 = vmatpush1.xpose.msra.mxu0 0.0
    %85 = vmatprep.subr.mxu0 0.0
    %86 = vmatpush1.xpose.msra.mxu0 0.0
    %87 = vmatprep.subr.mxu0 0.0
    %88 = vmatpush1.xpose.msra.mxu0 0.0
    %89 = vmatprep.subr.mxu0 0.0
    %90 = vmatpush1.xpose.msra.mxu0 0.0
    %91 = vmatprep.subr.mxu0 0.0
    %92 = vmatpush1.xpose.msra.mxu0 0.0
    %93 = vmatprep.subr.mxu0 0.0
    %94 = vmatpush1.xpose.msra.mxu0 0.0
    %95 = vmatprep.subr.mxu0 0.0
    %96 = vmatpush1.xpose.msra.mxu0 0.0
    %97 = vmatprep.subr.mxu0 0.0
    %98 = vmatpush1.xpose.msra.mxu0 0.0
    %99 = vmatprep.subr.mxu0 0.0
    %100 = vmatpush1.xpose.msra.mxu0 0.0
    %101 = vmatprep.subr.mxu0 0.0
    %102 = vmatpush1.xpose.msra.mxu0 0.0
    %103 = vmatprep.subr.mxu0 0.0
    %104 = vmatpush1.xpose.msra.mxu0 0.0
    %105 = vmatprep.subr.mxu0 0.0
    %106 = vmatpush1.xpose.msra.mxu0 0.0
    %107 = vmatprep.subr.mxu0 0.0
    %108 = vmatpush1.xpose.msra.mxu0 0.0
    %109 = vmatprep.subr.mxu0 0.0
    %110 = vmatpush1.xpose.msra.mxu0 0.0
    %111 = vmatprep.subr.mxu0 0.0
    %112 = vmatpush1.xpose.msra.mxu0 0.0
    %113 = vmatprep.subr.mxu0 0.0
    %114 = vmatpush1.xpose.msra.mxu0 0.0
    %115 = vmatprep.subr.mxu0 0.0
    %116 = vmatpush1.xpose.msra.mxu0 0.0
    %117 = vmatprep.subr.mxu0 0.0
    %118 = vmatpush1.xpose.msra.mxu0 0.0
    %119 = vmatprep.subr.mxu0 0.0
    %120 = vmatpush1.xpose.msra.mxu0 0.0
    %121 = vmatprep.subr.mxu0 0.0
    %122 = vmatpush1.xpose.msra.mxu0 0.0
    %123 = vmatprep.subr.mxu0 0.0
    %124 = vmatpush1.xpose.msra.mxu0 0.0
    %125 = vmatprep.subr.mxu0 0.0
    %126 = vmatpush1.xpose.msra.mxu0 0.0
    %127 = vmatprep.subr.mxu0 0.0
    %128 = vmatpush1.xpose.msra.mxu0 0.0
    %129 = vmatprep.subr.mxu0 0.0
    %130 = vmatpush1.xpose.msra.mxu0 0.0
    %131 = vmatprep.subr.mxu0 0.0
    %132 = vmatpush1.xpose.msra.mxu0 0.0
    %133 = vmatprep.subr.mxu0 0.0
    %134 = vmatpush1.xpose.msra.mxu0 0.0
    %135 = vmatprep.subr.mxu0 0.0
    %136 = vmatpush1.xpose.msra.mxu0 0.0
    %137 = vmatprep.mubr.f32.mxu0 0.0
    %138 = vmatmul.mubr.f32.gmra.mrb[0].mxu0 %v59
    %v139 = vpop.f32.mrb[0].mxu0
    %v140 = vadd.f32 %v40, %v139
    %v141 = vpop.f32.mrb[0].mxu0
    %142 = vmatprep.mubr.f32.mxu0 0.0
    %143 = vmatmul.mubr.f32.gmra.mrb[0].mxu0 %v62
    %v144 = vpop.f32.mrb[0].mxu0
    %v145 = vadd.f32 %v45, %v144
    %v146 = vpop.f32.mrb[0].mxu0
    %147 = vmatprep.mubr.f32.mxu0 0.0
    %148 = vmatmul.mubr.f32.gmra.mrb[0].mxu0 %v65
    %v149 = vpop.f32.mrb[0].mxu0
    %v150 = vadd.f32 %v50, %v149
    %v151 = vpop.f32.mrb[0].mxu0
    %152 = vmatprep.mubr.f32.mxu0 0.0
    %153 = vmatmul.mubr.f32.gmra.mrb[0].mxu0 %v68
    %v154 = vpop.f32.mrb[0].mxu0
    %v155 = vadd.f32 %v55, %v154
    %v156 = vpop.f32.mrb[0].mxu0
    %157 = vdwg.mxu0
    %v158 = vmax.f32 %v140, 0.0
    %v159 = vmax.f32 %v145, 0.0
    %v160 = vmax.f32 %v150, 0.0
    %v161 = vmax.f32 %v155, 0.0
    %v162 = vld [vmem:[%s3] sm:$0xff]
    %v163 = vld [vmem:[%s3 + $0x8] sm:$0xff]
    %v164 = vld [vmem:[%s3 + $0x10] sm:$0xff]
    %v165 = vld [vmem:[%s3 + $0x18] sm:$0xff]
    %v166 = vld [vmem:[%s3 + $0x20] sm:$0xff]
    %v167 = vld [vmem:[%s3 + $0x28] sm:$0xff]
    %v168 = vld [vmem:[%s3 + $0x30] sm:$0xff]
    %v169 = vld [vmem:[%s3 + $0x38] sm:$0xff]
    %v170 = vld [vmem:[%s4] sm:$0xff]
    %v171 = vld [vmem:[%s4 + $0x8] sm:$0xff]
    %v172 = vld [vmem:[%s4 + $0x10] sm:$0xff]
    %v173 = vld [vmem:[%s4 + $0x18] sm:$0xff]
    %v174 = vld [vmem:[%s4 + $0x20] sm:$0xff]
    %v175 = vld [vmem:[%s4 + $0x28] sm:$0xff]
    %v176 = vld [vmem:[%s4 + $0x30] sm:$0xff]
    %v177 = vld [vmem:[%s4 + $0x38] sm:$0xff]
    %179 = vset.pattern.permute.xlu0 0
    %180 = vperm.xlu0 %179, %v170
    %v181 = vpop.permute.xlu0 %180
    %184 = vset.pattern.permute.xlu0 0
    %185 = vperm.xlu0 %184, %v171
    %v186 = vpop.permute.xlu0 %185
    %189 = vset.pattern.permute.xlu0 0
    %190 = vperm.xlu0 %189, %v172
    %v191 = vpop.permute.xlu0 %190
    %194 = vset.pattern.permute.xlu0 0
    %195 = vperm.xlu0 %194, %v173
    %v196 = vpop.permute.xlu0 %195
    %199 = vset.pattern.permute.xlu0 0
    %200 = vperm.xlu0 %199, %v174
    %v201 = vpop.permute.xlu0 %200
    %204 = vset.pattern.permute.xlu0 0
    %205 = vperm.xlu0 %204, %v175
    %v206 = vpop.permute.xlu0 %205
    %209 = vset.pattern.permute.xlu0 0
    %210 = vperm.xlu0 %209, %v176
    %v211 = vpop.permute.xlu0 %210
    %214 = vset.pattern.permute.xlu0 0
    %215 = vperm.xlu0 %214, %v177
    %v216 = vpop.permute.xlu0 %215
    %v219 = vsel %vm57, %v162, 0
    %v222 = vsel %vm57, %v163, 0
    %v225 = vsel %vm57, %v164, 0
    %v228 = vsel %vm57, %v165, 0
    %v231 = vsel %vm57, %v166, 0
    %v234 = vsel %vm57, %v167, 0
    %v237 = vsel %vm57, %v168, 0
    %v240 = vsel %vm57, %v169, 0
    %242 = vmatprep.subr.mxu0 0.0
    %243 = vmatpush1.msra.mxu0 %v158
    %244 = vmatprep.subr.mxu0 0.0
    %245 = vmatpush1.msra.mxu0 %v159
    %246 = vmatprep.subr.mxu0 0.0
    %247 = vmatpush1.msra.mxu0 %v160
    %248 = vmatprep.subr.mxu0 0.0
    %249 = vmatpush1.msra.mxu0 %v161
    %250 = vmatprep.subr.mxu0 0.0
    %251 = vmatpush1.msra.mxu0 0.0
    %252 = vmatprep.subr.mxu0 0.0
    %253 = vmatpush1.msra.mxu0 0.0
    %254 = vmatprep.subr.mxu0 0.0
    %255 = vmatpush1.msra.mxu0 0.0
    %256 = vmatprep.subr.mxu0 0.0
    %257 = vmatpush1.msra.mxu0 0.0
    %258 = vmatprep.subr.mxu0 0.0
    %259 = vmatpush1.msra.mxu0 0.0
    %260 = vmatprep.subr.mxu0 0.0
    %261 = vmatpush1.msra.mxu0 0.0
    %262 = vmatprep.subr.mxu0 0.0
    %263 = vmatpush1.msra.mxu0 0.0
    %264 = vmatprep.subr.mxu0 0.0
    %265 = vmatpush1.msra.mxu0 0.0
    %266 = vmatprep.subr.mxu0 0.0
    %267 = vmatpush1.msra.mxu0 0.0
    %268 = vmatprep.subr.mxu0 0.0
    %269 = vmatpush1.msra.mxu0 0.0
    %270 = vmatprep.subr.mxu0 0.0
    %271 = vmatpush1.msra.mxu0 0.0
    %272 = vmatprep.subr.mxu0 0.0
    %273 = vmatpush1.msra.mxu0 0.0
    %274 = vmatprep.subr.mxu0 0.0
    %275 = vmatpush1.msra.mxu0 0.0
    %276 = vmatprep.subr.mxu0 0.0
    %277 = vmatpush1.msra.mxu0 0.0
    %278 = vmatprep.subr.mxu0 0.0
    %279 = vmatpush1.msra.mxu0 0.0
    %280 = vmatprep.subr.mxu0 0.0
    %281 = vmatpush1.msra.mxu0 0.0
    %282 = vmatprep.subr.mxu0 0.0
    %283 = vmatpush1.msra.mxu0 0.0
    %284 = vmatprep.subr.mxu0 0.0
    %285 = vmatpush1.msra.mxu0 0.0
    %286 = vmatprep.subr.mxu0 0.0
    %287 = vmatpush1.msra.mxu0 0.0
    %288 = vmatprep.subr.mxu0 0.0
    %289 = vmatpush1.msra.mxu0 0.0
    %290 = vmatprep.subr.mxu0 0.0
    %291 = vmatpush1.msra.mxu0 0.0
    %292 = vmatprep.subr.mxu0 0.0
    %293 = vmatpush1.msra.mxu0 0.0
    %294 = vmatprep.subr.mxu0 0.0
    %295 = vmatpush1.msra.mxu0 0.0
    %296 = vmatprep.subr.mxu0 0.0
    %297 = vmatpush1.msra.mxu0 0.0
    %298 = vmatprep.subr.mxu0 0.0
    %299 = vmatpush1.msra.mxu0 0.0
    %300 = vmatprep.subr.mxu0 0.0
    %301 = vmatpush1.msra.mxu0 0.0
    %302 = vmatprep.subr.mxu0 0.0
    %303 = vmatpush1.msra.mxu0 0.0
    %304 = vmatprep.subr.mxu0 0.0
    %305 = vmatpush1.msra.mxu0 0.0
    %306 = vmatprep.mubr.f32.mxu0 0.0
    %307 = vmatmul.mubr.f32.gmra.mrb[0].mxu0 %v219
    %v308 = vpop.f32.mrb[0].mxu0
    %v309 = vadd.f32 %v181, %v308
    %v310 = vpop.f32.mrb[0].mxu0
    %311 = vmatprep.mubr.f32.mxu0 0.0
    %312 = vmatmul.mubr.f32.gmra.mrb[0].mxu0 %v222
    %v313 = vpop.f32.mrb[0].mxu0
    %v314 = vadd.f32 %v186, %v313
    %v315 = vpop.f32.mrb[0].mxu0
    %316 = vmatprep.mubr.f32.mxu0 0.0
    %317 = vmatmul.mubr.f32.gmra.mrb[0].mxu0 %v225
    %v318 = vpop.f32.mrb[0].mxu0
    %v319 = vadd.f32 %v191, %v318
    %v320 = vpop.f32.mrb[0].mxu0
    %321 = vmatprep.mubr.f32.mxu0 0.0
    %322 = vmatmul.mubr.f32.gmra.mrb[0].mxu0 %v228
    %v323 = vpop.f32.mrb[0].mxu0
    %v324 = vadd.f32 %v196, %v323
    %v325 = vpop.f32.mrb[0].mxu0
    %326 = vmatprep.mubr.f32.mxu0 0.0
    %327 = vmatmul.mubr.f32.gmra.mrb[0].mxu0 %v231
    %v328 = vpop.f32.mrb[0].mxu0
    %v329 = vadd.f32 %v201, %v328
    %v330 = vpop.f32.mrb[0].mxu0
    %331 = vmatprep.mubr.f32.mxu0 0.0
    %332 = vmatmul.mubr.f32.gmra.mrb[0].mxu0 %v234
    %v333 = vpop.f32.mrb[0].mxu0
    %v334 = vadd.f32 %v206, %v333
    %v335 = vpop.f32.mrb[0].mxu0
    %336 = vmatprep.mubr.f32.mxu0 0.0
    %337 = vmatmul.mubr.f32.gmra.mrb[0].mxu0 %v237
    %v338 = vpop.f32.mrb[0].mxu0
    %v339 = vadd.f32 %v211, %v338
    %v340 = vpop.f32.mrb[0].mxu0
    %341 = vmatprep.mubr.f32.mxu0 0.0
    %342 = vmatmul.mubr.f32.gmra.mrb[0].mxu0 %v240
    %v343 = vpop.f32.mrb[0].mxu0
    %v344 = vadd.f32 %v216, %v343
    %v345 = vpop.f32.mrb[0].mxu0
    %346 = vdwg.mxu0
    %v347 = vmax.f32 %v309, 0.0
    %v348 = vmax.f32 %v314, 0.0
    %v349 = vmax.f32 %v319, 0.0
    %v350 = vmax.f32 %v324, 0.0
    %v351 = vmax.f32 %v329, 0.0
    %v352 = vmax.f32 %v334, 0.0
    %v353 = vmax.f32 %v339, 0.0
    %v354 = vmax.f32 %v344, 0.0
    %v355 = vld [vmem:[%s5] sm:$0xff]
    %v356 = vld [vmem:[%s5 + $0x8] sm:$0xff]
    %v357 = vld [vmem:[%s5 + $0x10] sm:$0xff]
    %v358 = vld [vmem:[%s5 + $0x18] sm:$0xff]
    %v359 = vld [vmem:[%s5 + $0x20] sm:$0xff]
    %v360 = vld [vmem:[%s5 + $0x28] sm:$0xff]
    %v361 = vld [vmem:[%s5 + $0x30] sm:$0xff]
    %v362 = vld [vmem:[%s5 + $0x38] sm:$0xff]
    %364 = vset.pattern.permute.xlu0 0
    %365 = vperm.xlu0 %364, %v355
    %v366 = vpop.permute.xlu0 %365
    %369 = vset.pattern.permute.xlu0 0
    %370 = vperm.xlu0 %369, %v356
    %v371 = vpop.permute.xlu0 %370
    %374 = vset.pattern.permute.xlu0 0
    %375 = vperm.xlu0 %374, %v357
    %v376 = vpop.permute.xlu0 %375
    %379 = vset.pattern.permute.xlu0 0
    %380 = vperm.xlu0 %379, %v358
    %v381 = vpop.permute.xlu0 %380
    %384 = vset.pattern.permute.xlu0 0
    %385 = vperm.xlu0 %384, %v359
    %v386 = vpop.permute.xlu0 %385
    %389 = vset.pattern.permute.xlu0 0
    %390 = vperm.xlu0 %389, %v360
    %v391 = vpop.permute.xlu0 %390
    %394 = vset.pattern.permute.xlu0 0
    %395 = vperm.xlu0 %394, %v361
    %v396 = vpop.permute.xlu0 %395
    %399 = vset.pattern.permute.xlu0 0
    %400 = vperm.xlu0 %399, %v362
    %v401 = vpop.permute.xlu0 %400
    %v403 = vmul.f32 %v347, %v366
    %v404 = vmul.f32 %v348, %v371
    %v405 = vmul.f32 %v349, %v376
    %v406 = vmul.f32 %v350, %v381
    %v407 = vmul.f32 %v351, %v386
    %v408 = vmul.f32 %v352, %v391
    %v409 = vmul.f32 %v353, %v396
    %v410 = vmul.f32 %v354, %v401
    %vm411 = vcmask 64512
    %v412 = vsel %vm411, %v403, 0.0
    %v413 = vsel %vm411, %v404, 0.0
    %v414 = vadd.f32 %v412, %v413
    %v415 = vsel %vm411, %v405, 0.0
    %v416 = vadd.f32 %v414, %v415
    %v417 = vsel %vm411, %v406, 0.0
    %v418 = vadd.f32 %v416, %v417
    %v419 = vsel %vm411, %v407, 0.0
    %v420 = vadd.f32 %v418, %v419
    %v421 = vsel %vm411, %v408, 0.0
    %v422 = vadd.f32 %v420, %v421
    %v423 = vsel %vm411, %v409, 0.0
    %v424 = vadd.f32 %v422, %v423
    %v425 = vsel %vm411, %v410, 0.0
    %v426 = vadd.f32 %v424, %v425
    %v427 = vrot.slane %v426, 4
    %v428 = vadd.f32 %v426, %v427
    %v429 = vrot.slane %v428, 2
    %v430 = vadd.f32 %v428, %v429
    %v431 = vrot.slane %v430, 1
    %v432 = vadd.f32 %v430, %v431
    %s433 = sld [smem:[#allocation2]]
    %v434 = vstv %s433
    %v435 = vadd.f32 %v432, %v434
    %vm436 = vcmask 57344
    %437 = vst.msk [vmem:[#allocation3] sm:$0x1] %vm436, %v435
    // Predicated region
    $region30: #{simple_nn_forward.1} parent=1 // pred_check
      _
    $region31: #{simple_nn_forward.1} parent=1 // pred_check_branch
      %439 = sbr.rel (0) target = $region33
    $region32: #{simple_nn_forward.1} parent=1 // pred_region
      %s441 = ssub.s32 16, 16
      %442 = vsyncadd [#allocation4], %s441
      %s444 = sshll.u32 [#allocation3], 4
      %s445 = int_to_ptr.vmem [resolvable:$true] %s444
      %447 = dma.vmem_to_hbm [thread:$0]  %s445, 16, %s7, [#allocation4]
    $region33: #{simple_nn_forward.1} parent=1 // pred_fallthru
      _
    // Predicated region
    $region34: #{simple_nn_forward.1} parent=1 // pred_check
      _
    $region35: #{simple_nn_forward.1} parent=1 // pred_check_branch
      %449 = sbr.rel (0) target = $region37
    $region36: #{simple_nn_forward.1} parent=1 // pred_region
      %450 = dma.done [#allocation4], 16
    $region37: #{simple_nn_forward.1} parent=1 // pred_fallthru
      _
    %451 = vsyncpa [#allocation4], 1

</llo_original>
